<compile_context>
chip_gen: v7x
topology: tpu7x:2x2x1
jax: 0.10.0
libtpu: 0.0.40
codegen_flags: <defaults>
</compile_context>

<pallas_src>
import jax
import jax.numpy as jnp
from jax.experimental import pallas as pl
from jax.experimental.pallas import tpu as pltpu

HIDDEN = 256
LANE = 128


def _round_up(x, m):
    return (x + m - 1) // m * m


def _cdiv(a, b):
    return (a + b - 1) // b


def _actor_kernel(ma_ref, x_ref, w1_ref, b1_ref, w2_ref, b2_ref,
                  w3_ref, b3_ref, out_ref):
    # fc1 + relu: bf16 MXU operands, f32 accumulation.
    x = x_ref[...].astype(jnp.bfloat16)
    h1 = jnp.dot(x, w1_ref[...], preferred_element_type=jnp.float32)
    h1 = jnp.maximum(h1 + b1_ref[...], 0.0)
    # fc2 + relu
    h2 = jnp.dot(h1.astype(jnp.bfloat16), w2_ref[...],
                 preferred_element_type=jnp.float32)
    h2 = jnp.maximum(h2 + b2_ref[...], 0.0)
    # action head + tanh, scaled by max_action (scalar read from SMEM)
    a = jnp.dot(h2.astype(jnp.bfloat16), w3_ref[...],
                preferred_element_type=jnp.float32)
    a = jnp.tanh(a + b3_ref[...])
    out_ref[...] = (ma_ref[0] * a).astype(out_ref.dtype)


def actor_forward(x, params, max_action, *, batch_block=512):
    """x: (B, obs_dim) f32. params: dict of w1,b1,w2,b2,w3,b3. Returns (B, act_dim) f32."""
    # Weights fed to the MXU as bf16; biases kept f32 (added post-accumulation).
    w1 = params["w1"].astype(jnp.bfloat16)
    w2 = params["w2"].astype(jnp.bfloat16)
    w3 = params["w3"].astype(jnp.bfloat16)
    b1 = jnp.reshape(params["b1"], (1, -1)).astype(jnp.float32)
    b2 = jnp.reshape(params["b2"], (1, -1)).astype(jnp.float32)
    b3 = jnp.reshape(params["b3"], (1, -1)).astype(jnp.float32)

    B, obs_dim = x.shape
    act_dim = w3.shape[1]

    # Pad the action head to a full 128-lane slab -> lane-dense output stores.
    act_pad = _round_up(max(act_dim, LANE), LANE)
    if act_pad != act_dim:
        w3 = jnp.pad(w3, ((0, 0), (0, act_pad - act_dim)))
        b3 = jnp.pad(b3, ((0, 0), (0, act_pad - act_dim)))

    # Batch tiling: at least 2 blocks (so v7x's two TensorCores both get work),
    # each <= batch_block rows, sized so padding waste stays small.
    n_blocks = max(2, _cdiv(B, batch_block))
    tb = _round_up(_cdiv(B, n_blocks), 8)
    b_pad = n_blocks * tb
    if b_pad != B:
        x = jnp.pad(x, ((0, b_pad - B), (0, 0)))

    grid = (n_blocks,)

    # Weights/biases: same block index every grid step -> loaded once, stay
    # resident in VMEM across the whole batch loop.
    def resident(shape):
        return pl.BlockSpec(shape, lambda i, ma: (0, 0))

    ma = jnp.asarray([max_action], dtype=jnp.float32)

    out = pl.pallas_call(
        _actor_kernel,
        out_shape=jax.ShapeDtypeStruct((b_pad, act_pad), jnp.float32),
        grid_spec=pltpu.PrefetchScalarGridSpec(
            num_scalar_prefetch=1,            # max_action lives in SMEM
            grid=grid,
            in_specs=[
                pl.BlockSpec((tb, obs_dim), lambda i, ma: (i, 0)),
                resident(w1.shape), resident(b1.shape),
                resident(w2.shape), resident(b2.shape),
                resident(w3.shape), resident(b3.shape),
            ],
            out_specs=pl.BlockSpec((tb, act_pad), lambda i, ma: (i, 0)),
        ),
        compiler_params=pltpu.CompilerParams(
            dimension_semantics=("parallel",)),   # shard batch over v7x's 2 TCs
    )(ma, x, w1, b1, w2, b2, w3, b3)

    # Trim padding (consumers that can tolerate the padded slab should fuse on
    # the padded output instead to avoid this extra HBM pass).
    return out[:B, :act_dim]


def init_params(key, obs_dim, act_dim, dtype=jnp.float32):
    """Deterministic init mimicking nn.Linear's uniform(-1/sqrt(fan_in), +1/sqrt(fan_in))."""
    ks = jax.random.split(key, 6)

    def linear(kw, kb, fan_in, fan_out):
        bound = 1.0 / jnp.sqrt(fan_in)
        w = jax.random.uniform(kw, (fan_in, fan_out), jnp.float32, -bound, bound)
        b = jax.random.uniform(kb, (1, fan_out), jnp.float32, -bound, bound)
        return w.astype(dtype), b.astype(dtype)

    w1, b1 = linear(ks[0], ks[1], obs_dim, HIDDEN)
    w2, b2 = linear(ks[2], ks[3], HIDDEN, HIDDEN)
    w3, b3 = linear(ks[4], ks[5], HIDDEN, act_dim)
    return {"w1": w1, "b1": b1, "w2": w2, "b2": b2, "w3": w3, "b3": b3}


def _reference(x, params, max_action):
    h1 = jax.nn.relu(x @ params["w1"] + params["b1"])
    h2 = jax.nn.relu(h1 @ params["w2"] + params["b2"])
    return max_action * jnp.tanh(h2 @ params["w3"] + params["b3"])


if __name__ == "__main__":
    # Small shapes consistent with the module: batch=2, obs_shape=16, action_shape=8.
    B, OBS, ACT = 2, 16, 8
    MAX_ACTION = 1.0

    key = jax.random.PRNGKey(0)
    k_x, k_p, k_x2 = jax.random.split(key, 3)
    x = jax.random.normal(k_x, (B, OBS), jnp.float32)
    params = init_params(k_p, OBS, ACT)

    out = actor_forward(x, params, MAX_ACTION)
    jax.block_until_ready(out)
    ref = _reference(x, params, MAX_ACTION)
    assert out.shape == (B, ACT)
    # bf16 MXU operands (f32 accumulation) -> looser tolerance than pure f32.
    assert jnp.allclose(out, ref, atol=2e-2, rtol=2e-2)

    # Also exercise the multi-tile batch path (non-multiple of the tile / of 8).
    B2 = 300
    x2 = jax.random.normal(k_x2, (B2, OBS), jnp.float32)
    out2 = actor_forward(x2, params, MAX_ACTION)
    jax.block_until_ready(out2)
    ref2 = _reference(x2, params, MAX_ACTION)
    assert out2.shape == (B2, ACT)
    assert jnp.allclose(out2, ref2, atol=2e-2, rtol=2e-2)

    print("KERNEL_OK")
</pallas_src>

<mosaic_0001>
module attributes {stable_mosaic.version = 11 : i64} {
  func.func @_actor_kernel(%arg0: i32, %arg1: memref<1xf32, #tpu.memory_space<smem>>, %arg2: memref<8x16xf32, #tpu.memory_space<vmem>>, %arg3: memref<16x256xbf16, #tpu.memory_space<vmem>>, %arg4: memref<1x256xf32, #tpu.memory_space<vmem>>, %arg5: memref<256x256xbf16, #tpu.memory_space<vmem>>, %arg6: memref<1x256xf32, #tpu.memory_space<vmem>>, %arg7: memref<256x128xbf16, #tpu.memory_space<vmem>>, %arg8: memref<1x128xf32, #tpu.memory_space<vmem>>, %arg9: memref<8x128xf32, #tpu.memory_space<vmem>>) attributes {dimension_semantics = [#tpu.dimension_semantics<parallel>], iteration_bounds = array<i64: 2>, scalar_prefetch = 1 : i64, scratch_operands = 0 : i64, tpu.core_type = #tpu.core_type<tc>, window_params = [{transform_indices = @transform_0, window_bounds = array<i64: 8, 16>}, {pipeline_mode = #tpu.pipeline_mode<synchronous>, transform_indices = @transform_1, window_bounds = array<i64: 16, 256>}, {pipeline_mode = #tpu.pipeline_mode<synchronous>, transform_indices = @transform_2, window_bounds = array<i64: 1, 256>}, {pipeline_mode = #tpu.pipeline_mode<synchronous>, transform_indices = @transform_3, window_bounds = array<i64: 256, 256>}, {pipeline_mode = #tpu.pipeline_mode<synchronous>, transform_indices = @transform_4, window_bounds = array<i64: 1, 256>}, {pipeline_mode = #tpu.pipeline_mode<synchronous>, transform_indices = @transform_5, window_bounds = array<i64: 256, 128>}, {pipeline_mode = #tpu.pipeline_mode<synchronous>, transform_indices = @transform_6, window_bounds = array<i64: 1, 128>}, {transform_indices = @transform_7, window_bounds = array<i64: 8, 128>}]} {
    %c0 = arith.constant 0 : index
    %c0_0 = arith.constant 0 : index
    %0 = vector.load %arg2[%c0, %c0_0] : memref<8x16xf32, #tpu.memory_space<vmem>>, vector<8x16xf32>
    %1 = arith.truncf %0 : vector<8x16xf32> to vector<8x16xbf16>
    %c0_1 = arith.constant 0 : index
    %c0_2 = arith.constant 0 : index
    %2 = vector.load %arg3[%c0_1, %c0_2] : memref<16x256xbf16, #tpu.memory_space<vmem>>, vector<16x256xbf16>
    %cst = arith.constant dense<0.000000e+00> : vector<8x256xf32>
    %3 = tpu.matmul %1, %2, %cst {dimension_numbers = #tpu.dot_dimension_numbers<[1], [0], [0], [1], [0, 0, 1, 1], [], []>} : vector<8x16xbf16>, vector<16x256xbf16>, vector<8x256xf32> -> vector<8x256xf32>
    %c0_3 = arith.constant 0 : index
    %c0_4 = arith.constant 0 : index
    %4 = vector.load %arg4[%c0_3, %c0_4] : memref<1x256xf32, #tpu.memory_space<vmem>>, vector<1x256xf32>
    %5 = vector.broadcast %4 : vector<1x256xf32> to vector<8x256xf32>
    %6 = arith.addf %3, %5 : vector<8x256xf32>
    %cst_5 = arith.constant 0.000000e+00 : f32
    %7 = vector.broadcast %cst_5 : f32 to vector<8x256xf32>
    %8 = arith.maximumf %6, %7 : vector<8x256xf32>
    %9 = arith.truncf %8 : vector<8x256xf32> to vector<8x256xbf16>
    %c0_6 = arith.constant 0 : index
    %c0_7 = arith.constant 0 : index
    %10 = vector.load %arg5[%c0_6, %c0_7] : memref<256x256xbf16, #tpu.memory_space<vmem>>, vector<256x256xbf16>
    %cst_8 = arith.constant dense<0.000000e+00> : vector<8x256xf32>
    %11 = tpu.matmul %9, %10, %cst_8 {dimension_numbers = #tpu.dot_dimension_numbers<[1], [0], [0], [1], [0, 0, 1, 1], [], []>} : vector<8x256xbf16>, vector<256x256xbf16>, vector<8x256xf32> -> vector<8x256xf32>
    %c0_9 = arith.constant 0 : index
    %c0_10 = arith.constant 0 : index
    %12 = vector.load %arg6[%c0_9, %c0_10] : memref<1x256xf32, #tpu.memory_space<vmem>>, vector<1x256xf32>
    %13 = vector.broadcast %12 : vector<1x256xf32> to vector<8x256xf32>
    %14 = arith.addf %11, %13 : vector<8x256xf32>
    %cst_11 = arith.constant 0.000000e+00 : f32
    %15 = vector.broadcast %cst_11 : f32 to vector<8x256xf32>
    %16 = arith.maximumf %14, %15 : vector<8x256xf32>
    %17 = arith.truncf %16 : vector<8x256xf32> to vector<8x256xbf16>
    %c0_12 = arith.constant 0 : index
    %c0_13 = arith.constant 0 : index
    %18 = vector.load %arg7[%c0_12, %c0_13] : memref<256x128xbf16, #tpu.memory_space<vmem>>, vector<256x128xbf16>
    %cst_14 = arith.constant dense<0.000000e+00> : vector<8x128xf32>
    %19 = tpu.matmul %17, %18, %cst_14 {dimension_numbers = #tpu.dot_dimension_numbers<[1], [0], [0], [1], [0, 0, 1, 1], [], []>} : vector<8x256xbf16>, vector<256x128xbf16>, vector<8x128xf32> -> vector<8x128xf32>
    %c0_15 = arith.constant 0 : index
    %c0_16 = arith.constant 0 : index
    %20 = vector.load %arg8[%c0_15, %c0_16] : memref<1x128xf32, #tpu.memory_space<vmem>>, vector<1x128xf32>
    %21 = vector.broadcast %20 : vector<1x128xf32> to vector<8x128xf32>
    %22 = arith.addf %19, %21 : vector<8x128xf32>
    %23 = math.tanh %22 : vector<8x128xf32>
    %c0_17 = arith.constant 0 : index
    %24 = memref.load %arg1[%c0_17] : memref<1xf32, #tpu.memory_space<smem>>
    %25 = vector.broadcast %24 : f32 to vector<8x128xf32>
    %26 = arith.mulf %25, %23 : vector<8x128xf32>
    %c0_18 = arith.constant 0 : index
    %c0_19 = arith.constant 0 : index
    %27 = vector.load %arg9[%c0_18, %c0_19] : memref<8x128xf32, #tpu.memory_space<vmem>>, vector<8x128xf32>
    tpu.vector_store %arg9[%c0_18, %c0_19], %26 {strides = array<i32>} : memref<8x128xf32, #tpu.memory_space<vmem>>, vector<8x128xf32>,
    return
  }
  func.func @transform_0(%arg0: i32, %arg1: memref<1xf32, #tpu.memory_space<smem>>) -> (i32, i32) {
    %c0_i32 = arith.constant 0 : i32
    %c0_i32_0 = arith.constant 0 : i32
    return %arg0, %c0_i32 : i32, i32
  }
  func.func @transform_1(%arg0: i32, %arg1: memref<1xf32, #tpu.memory_space<smem>>) -> (i32, i32) {
    %c0_i32 = arith.constant 0 : i32
    %c0_i32_0 = arith.constant 0 : i32
    %c0_i32_1 = arith.constant 0 : i32
    return %c0_i32, %c0_i32_0 : i32, i32
  }
  func.func @transform_2(%arg0: i32, %arg1: memref<1xf32, #tpu.memory_space<smem>>) -> (i32, i32) {
    %c0_i32 = arith.constant 0 : i32
    %c0_i32_0 = arith.constant 0 : i32
    %c0_i32_1 = arith.constant 0 : i32
    return %c0_i32, %c0_i32_0 : i32, i32
  }
  func.func @transform_3(%arg0: i32, %arg1: memref<1xf32, #tpu.memory_space<smem>>) -> (i32, i32) {
    %c0_i32 = arith.constant 0 : i32
    %c0_i32_0 = arith.constant 0 : i32
    %c0_i32_1 = arith.constant 0 : i32
    return %c0_i32, %c0_i32_0 : i32, i32
  }
  func.func @transform_4(%arg0: i32, %arg1: memref<1xf32, #tpu.memory_space<smem>>) -> (i32, i32) {
    %c0_i32 = arith.constant 0 : i32
    %c0_i32_0 = arith.constant 0 : i32
    %c0_i32_1 = arith.constant 0 : i32
    return %c0_i32, %c0_i32_0 : i32, i32
  }
  func.func @transform_5(%arg0: i32, %arg1: memref<1xf32, #tpu.memory_space<smem>>) -> (i32, i32) {
    %c0_i32 = arith.constant 0 : i32
    %c0_i32_0 = arith.constant 0 : i32
    %c0_i32_1 = arith.constant 0 : i32
    return %c0_i32, %c0_i32_0 : i32, i32
  }
  func.func @transform_6(%arg0: i32, %arg1: memref<1xf32, #tpu.memory_space<smem>>) -> (i32, i32) {
    %c0_i32 = arith.constant 0 : i32
    %c0_i32_0 = arith.constant 0 : i32
    %c0_i32_1 = arith.constant 0 : i32
    return %c0_i32, %c0_i32_0 : i32, i32
  }
  func.func @transform_7(%arg0: i32, %arg1: memref<1xf32, #tpu.memory_space<smem>>) -> (i32, i32) {
    %c0_i32 = arith.constant 0 : i32
    %c0_i32_0 = arith.constant 0 : i32
    return %arg0, %c0_i32 : i32, i32
  }
}

</mosaic_0001>

<llo_original>
// kernel: tpu_custom_call.1
$region0: #{tpu_custom_call.1}
  #allocation0 [shape = 'u32[]', space=smem, size = 0x4, offset = 0x4, fixed_abs, tag = 'smem constant byte address 0x4 - core index']
  #allocation1 [shape = 'u32[144,128]{1,0:T(1,128)}', space=vmem, size = 0x12000, scoped, tag = 'internal scratch']
  #allocation2 [shape = 's32[1]{0}', space=sflag, size = 0x4, scoped, tag = 'scoped memory for tpu_custom_call.1']
  #allocation3 [shape = 'f32[1]{0:T(128)S(6)}', space=smem, size = 0x200, scoped, tag = 'prefetched SMEM operand 0']
  %s0 = inlined_call_operand.<no memory space> [shape: f32[1], index: 0, kind: input, shape index: {}]
  %s1 = inlined_call_operand.hbm [shape: f32[16,16], index: 1, kind: input, shape index: {}]
  %s2 = inlined_call_operand.hbm [shape: bf16[16,256], index: 2, kind: input, shape index: {}]
  %s3 = inlined_call_operand.vmem [shape: f32[1,256], index: 3, kind: input, shape index: {}]
  %s4 = inlined_call_operand.hbm [shape: bf16[256,256], index: 4, kind: input, shape index: {}]
  %s5 = inlined_call_operand.vmem [shape: f32[1,256], index: 5, kind: input, shape index: {}]
  %s6 = inlined_call_operand.hbm [shape: bf16[256,128], index: 6, kind: input, shape index: {}]
  %s7 = inlined_call_operand.vmem [shape: f32[1,128], index: 7, kind: input, shape index: {}]
  %s8 = inlined_call_operand.hbm [shape: f32[16,128], index: 8, kind: output, shape index: {}]
  %s9 = sld [smem:[#allocation0]]
  $region77: #{tpu_custom_call.1} parent=0
    _
  %s11 = ssub.s32 1, %s9
  %s12 = scalar_select 0, %s11, %s9
  %13 = sst [smem:[#allocation3]] %s0
  $region1: #{tpu_custom_call.1} parent=0
    #allocation4 [shape = 'u8[8192]{0}', space=vmem, size = 0x2000, scoped, tag = 'input window, operand 1']
    #allocation5 [shape = 's32[2]{0}', space=sflag, size = 0x8, scoped, tag = 'scoped memory for tpu_custom_call.1']
    #allocation6 [shape = 's32[2]{0}', space=sflag, size = 0x8, scoped, tag = 'scoped memory for tpu_custom_call.1']
    #allocation7 [shape = 'u8[8192]{0}', space=vmem, size = 0x2000, scoped, tag = 'input window, operand 2, single buffered']
    #allocation8 [shape = 's32[1]{0}', space=sflag, size = 0x4, scoped, tag = 'scoped memory for tpu_custom_call.1']
    #allocation9 [shape = 'u8[131072]{0}', space=vmem, size = 0x20000, scoped, tag = 'input window, operand 4, single buffered']
    #allocation10 [shape = 'u8[65536]{0}', space=vmem, size = 0x10000, scoped, tag = 'input window, operand 6, single buffered']
    #allocation11 [shape = 's32[1]{0}', space=sflag, size = 0x4, scoped, tag = 'scoped memory for tpu_custom_call.1']
    #allocation12 [shape = 'u8[8192]{0}', space=vmem, size = 0x2000, scoped, tag = 'output window, operand 0']
    %14 = vsyncpa [#allocation5], 0
    %s15 = scalar_lea.sflag [#allocation5], 1
    %16 = vsyncpa %s15, 0
    %17 = vsyncpa [#allocation8], 0
    %18 = vsyncpa [#allocation11], 0
    %19 = vsyncpa [#allocation6], 0
    %s20 = scalar_lea.sflag [#allocation6], 1
    %21 = vsyncpa %s20, 0
    loop: start=0, step=1, limit=4
    $region2: #{tpu_custom_call.1} parent=1 // loop_pre_header
      _
    $region3: #{tpu_custom_call.1} parent=1 // loop_header
      %s23 = sphi 0, %s27
      %p24 = scmp.ge.s32.totalorder %s23, 4
      %s33 = sphi 0, %s35
      %s36 = sphi 0, %s33
      %s37 = sphi 0, %s36
      %s53 = sphi 0, %s37
      %s57 = sphi 0, %s57
      %s59 = sphi 0, %s57
      %s60 = sphi 0, %s59
      %s74 = sphi 0, %s60
      %s78 = sphi 0, %s78
      %s80 = sphi 0, %s78
      %s81 = sphi 0, %s80
      %s95 = sphi 0, %s81
      %s99 = sphi 0, %s99
      %s101 = sphi 0, %s99
      %s102 = sphi 0, %s101
      %s116 = sphi 0, %s102
      %s120 = sphi 0, %s120
      %s122 = sphi 0, %s120
      %s123 = sphi 0, %s122
      %s137 = sphi 0, %s123
      %s141 = sphi 0, %s141
      %s143 = sphi 0, %s141
      %s144 = sphi 0, %s143
      %s158 = sphi 0, %s144
      %s162 = sphi 0, %s162
      %s164 = sphi 0, %s162
      %s165 = sphi 0, %s164
      %s179 = sphi 0, %s165
      %s185 = sphi 0, %s187
      %s188 = sphi 0, %s185
      %s189 = sphi 0, %s188
      %s205 = sphi 0, %s189
    $region4: #{tpu_custom_call.1} parent=1 // loop_header_branch
      %26 = sbr.rel (%p24) target = $region8
    $region5: #{tpu_custom_call.1} parent=1 // loop_body
      %s28 = ssub.s32 %s23, 1
      %s29 = ssub.s32 %s23, 2
      %s30 = sadd.s32 %s23, 1
      %s31 = ssub.s32 %s23, %s30
      %p32 = scmp.eq.s32.totalorder %s31, 0
      %s34 = sadd.s32 %s33, 1
      %s35 = scalar_select %p32, %s33, %s34
      %p38 = pneg %p32
      %p39 = scmp.eq.s32.totalorder %s23, 1
      %p40 = por %p38, %p39
      %p41 = scmp.ne.s32.totalorder %s33, %s36
      %p42 = scmp.eq.s32.totalorder %s23, 0
      %p43 = por %p41, %p42
      %p44 = scmp.ne.s32.totalorder %s33, %s36
      %p45 = scmp.eq.s32.totalorder %s28, 1
      %p46 = por %p44, %p45
      %p47 = scmp.ne.s32.totalorder %s36, %s37
      %p48 = scmp.eq.s32.totalorder %s28, 0
      %p49 = por %p47, %p48
      %p50 = scmp.ne.s32.totalorder %s36, %s37
      %p51 = scmp.eq.s32.totalorder %s29, 1
      %p52 = por %p50, %p51
      %p54 = scmp.ne.s32.totalorder %s37, %s53
      %p55 = scmp.eq.s32.totalorder %s29, 0
      %p56 = por %p54, %p55
      %s58 = sadd.s32 %s57, 1
      %p61 = scmp.eq.s32.totalorder %s23, 1
      %p62 = scmp.ne.s32.totalorder %s57, %s59
      %p63 = scmp.eq.s32.totalorder %s23, 0
      %p64 = por %p62, %p63
      %p65 = scmp.ne.s32.totalorder %s57, %s59
      %p66 = scmp.eq.s32.totalorder %s28, 1
      %p67 = por %p65, %p66
      %p68 = scmp.ne.s32.totalorder %s59, %s60
      %p69 = scmp.eq.s32.totalorder %s28, 0
      %p70 = por %p68, %p69
      %p71 = scmp.ne.s32.totalorder %s59, %s60
      %p72 = scmp.eq.s32.totalorder %s29, 1
      %p73 = por %p71, %p72
      %p75 = scmp.ne.s32.totalorder %s60, %s74
      %p76 = scmp.eq.s32.totalorder %s29, 0
      %p77 = por %p75, %p76
      %s79 = sadd.s32 %s78, 1
      %p82 = scmp.eq.s32.totalorder %s23, 1
      %p83 = scmp.ne.s32.totalorder %s78, %s80
      %p84 = scmp.eq.s32.totalorder %s23, 0
      %p85 = por %p83, %p84
      %p86 = scmp.ne.s32.totalorder %s78, %s80
      %p87 = scmp.eq.s32.totalorder %s28, 1
      %p88 = por %p86, %p87
      %p89 = scmp.ne.s32.totalorder %s80, %s81
      %p90 = scmp.eq.s32.totalorder %s28, 0
      %p91 = por %p89, %p90
      %p92 = scmp.ne.s32.totalorder %s80, %s81
      %p93 = scmp.eq.s32.totalorder %s29, 1
      %p94 = por %p92, %p93
      %p96 = scmp.ne.s32.totalorder %s81, %s95
      %p97 = scmp.eq.s32.totalorder %s29, 0
      %p98 = por %p96, %p97
      %s100 = sadd.s32 %s99, 1
      %p103 = scmp.eq.s32.totalorder %s23, 1
      %p104 = scmp.ne.s32.totalorder %s99, %s101
      %p105 = scmp.eq.s32.totalorder %s23, 0
      %p106 = por %p104, %p105
      %p107 = scmp.ne.s32.totalorder %s99, %s101
      %p108 = scmp.eq.s32.totalorder %s28, 1
      %p109 = por %p107, %p108
      %p110 = scmp.ne.s32.totalorder %s101, %s102
      %p111 = scmp.eq.s32.totalorder %s28, 0
      %p112 = por %p110, %p111
      %p113 = scmp.ne.s32.totalorder %s101, %s102
      %p114 = scmp.eq.s32.totalorder %s29, 1
      %p115 = por %p113, %p114
      %p117 = scmp.ne.s32.totalorder %s102, %s116
      %p118 = scmp.eq.s32.totalorder %s29, 0
      %p119 = por %p117, %p118
      %s121 = sadd.s32 %s120, 1
      %p124 = scmp.eq.s32.totalorder %s23, 1
      %p125 = scmp.ne.s32.totalorder %s120, %s122
      %p126 = scmp.eq.s32.totalorder %s23, 0
      %p127 = por %p125, %p126
      %p128 = scmp.ne.s32.totalorder %s120, %s122
      %p129 = scmp.eq.s32.totalorder %s28, 1
      %p130 = por %p128, %p129
      %p131 = scmp.ne.s32.totalorder %s122, %s123
      %p132 = scmp.eq.s32.totalorder %s28, 0
      %p133 = por %p131, %p132
      %p134 = scmp.ne.s32.totalorder %s122, %s123
      %p135 = scmp.eq.s32.totalorder %s29, 1
      %p136 = por %p134, %p135
      %p138 = scmp.ne.s32.totalorder %s123, %s137
      %p139 = scmp.eq.s32.totalorder %s29, 0
      %p140 = por %p138, %p139
      %s142 = sadd.s32 %s141, 1
      %p145 = scmp.eq.s32.totalorder %s23, 1
      %p146 = scmp.ne.s32.totalorder %s141, %s143
      %p147 = scmp.eq.s32.totalorder %s23, 0
      %p148 = por %p146, %p147
      %p149 = scmp.ne.s32.totalorder %s141, %s143
      %p150 = scmp.eq.s32.totalorder %s28, 1
      %p151 = por %p149, %p150
      %p152 = scmp.ne.s32.totalorder %s143, %s144
      %p153 = scmp.eq.s32.totalorder %s28, 0
      %p154 = por %p152, %p153
      %p155 = scmp.ne.s32.totalorder %s143, %s144
      %p156 = scmp.eq.s32.totalorder %s29, 1
      %p157 = por %p155, %p156
      %p159 = scmp.ne.s32.totalorder %s144, %s158
      %p160 = scmp.eq.s32.totalorder %s29, 0
      %p161 = por %p159, %p160
      %s163 = sadd.s32 %s162, 1
      %p166 = scmp.eq.s32.totalorder %s23, 1
      %p167 = scmp.ne.s32.totalorder %s162, %s164
      %p168 = scmp.eq.s32.totalorder %s23, 0
      %p169 = por %p167, %p168
      %p170 = scmp.ne.s32.totalorder %s162, %s164
      %p171 = scmp.eq.s32.totalorder %s28, 1
      %p172 = por %p170, %p171
      %p173 = scmp.ne.s32.totalorder %s164, %s165
      %p174 = scmp.eq.s32.totalorder %s28, 0
      %p175 = por %p173, %p174
      %p176 = scmp.ne.s32.totalorder %s164, %s165
      %p177 = scmp.eq.s32.totalorder %s29, 1
      %p178 = por %p176, %p177
      %p180 = scmp.ne.s32.totalorder %s165, %s179
      %p181 = scmp.eq.s32.totalorder %s29, 0
      %p182 = por %p180, %p181
      %s183 = ssub.s32 %s23, %s30
      %p184 = scmp.eq.s32.totalorder %s183, 0
      %s186 = sadd.s32 %s185, 1
      %s187 = scalar_select %p184, %s185, %s186
      %p190 = pneg %p184
      %p191 = scmp.eq.s32.totalorder %s23, 1
      %p192 = por %p190, %p191
      %p193 = scmp.ne.s32.totalorder %s185, %s188
      %p194 = scmp.eq.s32.totalorder %s23, 0
      %p195 = por %p193, %p194
      %p196 = scmp.ne.s32.totalorder %s185, %s188
      %p197 = scmp.eq.s32.totalorder %s28, 1
      %p198 = por %p196, %p197
      %p199 = scmp.ne.s32.totalorder %s188, %s189
      %p200 = scmp.eq.s32.totalorder %s28, 0
      %p201 = por %p199, %p200
      %p202 = scmp.ne.s32.totalorder %s188, %s189
      %p203 = scmp.eq.s32.totalorder %s29, 1
      %p204 = por %p202, %p203
      %p206 = scmp.ne.s32.totalorder %s189, %s205
      %p207 = scmp.eq.s32.totalorder %s29, 0
      %p208 = por %p206, %p207
      %p209 = scmp.le.s32.totalorder 1, %s23
      %p210 = scmp.lt.s32.totalorder %s23, 3
      %p211 = pnand %p209, %p210
      %p212 = pneg %p211
      // Predicated region
      $region9: #{tpu_custom_call.1} parent=5 // pred_check
        _
      $region10: #{tpu_custom_call.1} parent=5 // pred_check_branch
        %214 = sbr.rel (%p211) target = $region12
      $region11: #{tpu_custom_call.1} parent=5 // pred_region
        %s215 = ssub.s32 %s23, 1
        // Predicated region
        $region13: #{tpu_custom_call.1} parent=11 // pred_check
          %p216 = pneg %p70
        $region14: #{tpu_custom_call.1} parent=11 // pred_check_branch
          %218 = sbr.rel (%p216) target = $region16
        $region15: #{tpu_custom_call.1} parent=11 // pred_region
          %s220 = ssub.s32 256, 256
          %221 = vsyncadd [#allocation8], %s220
          %s222 = sshll.u32 [#allocation7], 4
          %s223 = int_to_ptr.vmem [resolvable:$true] %s222
          %228 = dma.hbm_to_vmem [thread:$0]  %s2, 256, %s223, [#allocation8], 128, 128, 8
        $region16: #{tpu_custom_call.1} parent=11 // pred_fallthru
          _
        // Predicated region
        $region17: #{tpu_custom_call.1} parent=11 // pred_check
          %p229 = pneg %p91
        $region18: #{tpu_custom_call.1} parent=11 // pred_check_branch
          %231 = sbr.rel (%p229) target = $region20
        $region19: #{tpu_custom_call.1} parent=11 // pred_region
          _
        $region20: #{tpu_custom_call.1} parent=11 // pred_fallthru
          _
        // Predicated region
        $region21: #{tpu_custom_call.1} parent=11 // pred_check
          %p232 = pneg %p112
        $region22: #{tpu_custom_call.1} parent=11 // pred_check_branch
          %234 = sbr.rel (%p232) target = $region24
        $region23: #{tpu_custom_call.1} parent=11 // pred_region
          %s236 = ssub.s32 4096, 4096
          %237 = vsyncadd [#allocation8], %s236
          %s238 = sshll.u32 [#allocation9], 4
          %s239 = int_to_ptr.vmem [resolvable:$true] %s238
          %244 = dma.hbm_to_vmem [thread:$0]  %s4, 4096, %s239, [#allocation8], 128, 128, 8
        $region24: #{tpu_custom_call.1} parent=11 // pred_fallthru
          _
        // Predicated region
        $region25: #{tpu_custom_call.1} parent=11 // pred_check
          %p245 = pneg %p133
        $region26: #{tpu_custom_call.1} parent=11 // pred_check_branch
          %247 = sbr.rel (%p245) target = $region28
        $region27: #{tpu_custom_call.1} parent=11 // pred_region
          _
        $region28: #{tpu_custom_call.1} parent=11 // pred_fallthru
          _
        // Predicated region
        $region29: #{tpu_custom_call.1} parent=11 // pred_check
          %p248 = pneg %p154
        $region30: #{tpu_custom_call.1} parent=11 // pred_check_branch
          %250 = sbr.rel (%p248) target = $region32
        $region31: #{tpu_custom_call.1} parent=11 // pred_region
          %s252 = ssub.s32 2048, 2048
          %253 = vsyncadd [#allocation11], %s252
          %s254 = sshll.u32 [#allocation10], 4
          %s255 = int_to_ptr.vmem [resolvable:$true] %s254
          %260 = dma.hbm_to_vmem [thread:$0]  %s6, 2048, %s255, [#allocation11], 64, 64, 4
        $region32: #{tpu_custom_call.1} parent=11 // pred_fallthru
          _
        // Predicated region
        $region33: #{tpu_custom_call.1} parent=11 // pred_check
          %p261 = pneg %p175
        $region34: #{tpu_custom_call.1} parent=11 // pred_check_branch
          %263 = sbr.rel (%p261) target = $region36
        $region35: #{tpu_custom_call.1} parent=11 // pred_region
          _
        $region36: #{tpu_custom_call.1} parent=11 // pred_fallthru
          _
      $region12: #{tpu_custom_call.1} parent=5 // pred_fallthru
        _
      %p264 = scmp.lt.s32.totalorder %s23, 2
      // Predicated region
      $region37: #{tpu_custom_call.1} parent=5 // pred_check
        %p265 = pneg %p264
      $region38: #{tpu_custom_call.1} parent=5 // pred_check_branch
        %267 = sbr.rel (%p265) target = $region40
      $region39: #{tpu_custom_call.1} parent=5 // pred_region
        // Predicated region
        $region41: #{tpu_custom_call.1} parent=39 // pred_check
          %p268 = pneg %p43
        $region42: #{tpu_custom_call.1} parent=39 // pred_check_branch
          %270 = sbr.rel (%p268) target = $region44
        $region43: #{tpu_custom_call.1} parent=39 // pred_region
          %s271 = sand.u32 %s33, 1
          %s272 = scalar_lea.sflag [#allocation5], %s271
          %s273 = sand.u32 %s33, 1
          %s274 = smul.addr %s273, 8
          %s275 = scalar_lea.vmem [#allocation4], %s274
          %s277 = ssub.s32 128, 128
          %278 = vsyncadd %s272, %s277
          %s279 = smul.addr %s23, 128
          %s280 = scalar_lea.hbm %s1, %s279
          %s282 = sshll.u32 %s275, 4
          %s283 = int_to_ptr.vmem [resolvable:$true] %s282
          %285 = dma.hbm_to_vmem [thread:$0]  %s280, 128, %s283, %s272
        $region44: #{tpu_custom_call.1} parent=39 // pred_fallthru
          _
      $region40: #{tpu_custom_call.1} parent=5 // pred_fallthru
        _
      %p286 = scmp.le.s32.totalorder 1, %s23
      %p287 = scmp.lt.s32.totalorder %s23, 3
      %p288 = pnand %p286, %p287
      %p289 = pneg %p288
      // Predicated region
      $region45: #{tpu_custom_call.1} parent=5 // pred_check
        _
      $region46: #{tpu_custom_call.1} parent=5 // pred_check_branch
        %291 = sbr.rel (%p288) target = $region48
      $region47: #{tpu_custom_call.1} parent=5 // pred_region
        %s292 = ssub.s32 %s23, 1
        %s293 = sand.u32 %s36, 1
        %s294 = scalar_lea.sflag [#allocation5], %s293
        %s295 = sand.u32 %s36, 1
        %s296 = smul.addr %s295, 8
        %s297 = scalar_lea.vmem [#allocation4], %s296
        // Predicated region
        $region49: #{tpu_custom_call.1} parent=47 // pred_check
          %p298 = pneg %p49
        $region50: #{tpu_custom_call.1} parent=47 // pred_check_branch
          %300 = sbr.rel (%p298) target = $region52
        $region51: #{tpu_custom_call.1} parent=47 // pred_region
          %301 = dma.done %s294, 128
        $region52: #{tpu_custom_call.1} parent=47 // pred_fallthru
          _
        // Predicated region
        $region53: #{tpu_custom_call.1} parent=47 // pred_check
          %p302 = pneg %p70
        $region54: #{tpu_custom_call.1} parent=47 // pred_check_branch
          %304 = sbr.rel (%p302) target = $region56
        $region55: #{tpu_custom_call.1} parent=47 // pred_region
          %305 = dma.done [#allocation8], 256
        $region56: #{tpu_custom_call.1} parent=47 // pred_fallthru
          _
        // Predicated region
        $region57: #{tpu_custom_call.1} parent=47 // pred_check
          %p306 = pneg %p112
        $region58: #{tpu_custom_call.1} parent=47 // pred_check_branch
          %308 = sbr.rel (%p306) target = $region60
        $region59: #{tpu_custom_call.1} parent=47 // pred_region
          %309 = dma.done [#allocation8], 4096
        $region60: #{tpu_custom_call.1} parent=47 // pred_fallthru
          _
        // Predicated region
        $region61: #{tpu_custom_call.1} parent=47 // pred_check
          %p310 = pneg %p154
        $region62: #{tpu_custom_call.1} parent=47 // pred_check_branch
          %312 = sbr.rel (%p310) target = $region64
        $region63: #{tpu_custom_call.1} parent=47 // pred_region
          %313 = dma.done [#allocation11], 2048
        $region64: #{tpu_custom_call.1} parent=47 // pred_fallthru
          _
        %s314 = sand.u32 %s36, 1
        %s315 = scalar_lea.sflag [#allocation5], %s314
        %s316 = sand.u32 %s36, 1
        %s317 = smul.addr %s316, 8
        %s318 = scalar_lea.vmem [#allocation4], %s317
        %p319 = pneg %p49
        %p320 = pneg %p46
        %p321 = pneg %p70
        %p322 = pneg %p67
        %p323 = pneg %p91
        %p324 = pneg %p88
        %p325 = pneg %p112
        %p326 = pneg %p109
        %p327 = pneg %p133
        %p328 = pneg %p130
        %p329 = pneg %p154
        %p330 = pneg %p151
        %p331 = pneg %p175
        %p332 = pneg %p172
        %p333 = pneg %p201
        %p334 = pneg %p198
        %s335 = sand.u32 %s188, 1
        %s336 = scalar_lea.sflag [#allocation6], %s335
        %s337 = sand.u32 %s188, 1
        %s338 = smul.addr %s337, 8
        %s339 = scalar_lea.vmem [#allocation12], %s338
        %v341 = vld [vmem:[%s297] sm:$0xff]
        %v342 = vpack.c.bf16 %v341, %v341
        %v343 = vld [vmem:[#allocation7] sm:$0xff]
        %v344 = vld [vmem:[#allocation7 + $0x8] sm:$0xff]
        %v345 = vld [vmem:[%s3] sm:$0x3]
        %v347 = vlaneseq
        %v348 = vshrl.u32 %v347, 7
        %v349 = vsub.s32 0, %v348
        %v350 = vrot.slane %v345, %v349
        %v351 = vlaneseq
        %v352 = vshrl.u32 %v351, 7
        %v353 = vsub.s32 1, %v352
        %v354 = vrot.slane %v345, %v353
        %v359 = vunpack.c.l.b16 %v343
        %v360 = vunpack.c.h.b16 %v343
        %v361 = vunpack.c.l.b16 %v344
        %v362 = vunpack.c.h.b16 %v344
        %v363 = vpack.c.b16 %v361, %v359
        %v364 = vpack.c.b16 %v362, %v360
        %vm367 = vcmask 130048
        %v369 = vsel %vm367, %v342, 0
        %371 = vmatprep.subr.bf16.mxu0 %v364
        %372 = vmatpush1.bf16.msra.mxu0 %v363
        %373 = vmatprep.subr.bf16.mxu0 0
        %374 = vmatpush1.bf16.msra.mxu0 0
        %375 = vmatprep.subr.bf16.mxu0 0
        %376 = vmatpush1.bf16.msra.mxu0 0
        %377 = vmatprep.subr.bf16.mxu0 0
        %378 = vmatpush1.bf16.msra.mxu0 0
        %379 = vmatprep.subr.bf16.mxu0 0
        %380 = vmatpush1.bf16.msra.mxu0 0
        %381 = vmatprep.subr.bf16.mxu0 0
        %382 = vmatpush1.bf16.msra.mxu0 0
        %383 = vmatprep.subr.bf16.mxu0 0
        %384 = vmatpush1.bf16.msra.mxu0 0
        %385 = vmatprep.subr.bf16.mxu0 0
        %386 = vmatpush1.bf16.msra.mxu0 0
        %387 = vmatprep.subr.bf16.mxu0 0
        %388 = vmatpush1.bf16.msra.mxu0 0
        %389 = vmatprep.subr.bf16.mxu0 0
        %390 = vmatpush1.bf16.msra.mxu0 0
        %391 = vmatprep.subr.bf16.mxu0 0
        %392 = vmatpush1.bf16.msra.mxu0 0
        %393 = vmatprep.subr.bf16.mxu0 0
        %394 = vmatpush1.bf16.msra.mxu0 0
        %395 = vmatprep.subr.bf16.mxu0 0
        %396 = vmatpush1.bf16.msra.mxu0 0
        %397 = vmatprep.subr.bf16.mxu0 0
        %398 = vmatpush1.bf16.msra.mxu0 0
        %399 = vmatprep.subr.bf16.mxu0 0
        %400 = vmatpush1.bf16.msra.mxu0 0
        %401 = vmatprep.subr.bf16.mxu0 0
        %402 = vmatpush1.bf16.msra.mxu0 0
        %403 = vmatprep.mubr.bf16.mxu0 0
        %404 = vmatmul.mubr.bf16.gmra.mrb[0].mxu0 %v369
        %v405 = vpop.f32.mrb[0].mxu0
        %v406 = vadd.f32 %v350, %v405
        %v407 = vpop.f32.mrb[0].mxu0
        %v408 = vadd.f32 %v354, %v407
        %v409 = vpop.f32.mrb[0].mxu0
        %v410 = vpop.f32.mrb[0].mxu0
        %411 = vdwg.mxu0
        %v412 = vmax.f32 %v406, 0.0
        %v413 = vmax.f32 %v408, 0.0
        %v414 = vpack.c.bf16 %v412, %v412
        %v415 = vpack.c.bf16 %v413, %v413
        %v416 = vld [vmem:[#allocation9] sm:$0xff]
        %v417 = vld [vmem:[#allocation9 + $0x8] sm:$0xff]
        %v418 = vld [vmem:[#allocation9 + $0x10] sm:$0xff]
        %v419 = vld [vmem:[#allocation9 + $0x18] sm:$0xff]
        %v420 = vld [vmem:[#allocation9 + $0x20] sm:$0xff]
        %v421 = vld [vmem:[#allocation9 + $0x28] sm:$0xff]
        %v422 = vld [vmem:[#allocation9 + $0x30] sm:$0xff]
        %v423 = vld [vmem:[#allocation9 + $0x38] sm:$0xff]
        %v424 = vld [vmem:[#allocation9 + $0x40] sm:$0xff]
        %v425 = vld [vmem:[#allocation9 + $0x48] sm:$0xff]
        %v426 = vld [vmem:[#allocation9 + $0x50] sm:$0xff]
        %v427 = vld [vmem:[#allocation9 + $0x58] sm:$0xff]
        %v428 = vld [vmem:[#allocation9 + $0x60] sm:$0xff]
        %v429 = vld [vmem:[#allocation9 + $0x68] sm:$0xff]
        %v430 = vld [vmem:[#allocation9 + $0x70] sm:$0xff]
        %v431 = vld [vmem:[#allocation9 + $0x78] sm:$0xff]
        %v432 = vld [vmem:[#allocation9 + $0x80] sm:$0xff]
        %v433 = vld [vmem:[#allocation9 + $0x88] sm:$0xff]
        %v434 = vld [vmem:[#allocation9 + $0x90] sm:$0xff]
        %v435 = vld [vmem:[#allocation9 + $0x98] sm:$0xff]
        %v436 = vld [vmem:[#allocation9 + $0xa0] sm:$0xff]
        %v437 = vld [vmem:[#allocation9 + $0xa8] sm:$0xff]
        %v438 = vld [vmem:[#allocation9 + $0xb0] sm:$0xff]
        %v439 = vld [vmem:[#allocation9 + $0xb8] sm:$0xff]
        %v440 = vld [vmem:[#allocation9 + $0xc0] sm:$0xff]
        %v441 = vld [vmem:[#allocation9 + $0xc8] sm:$0xff]
        %v442 = vld [vmem:[#allocation9 + $0xd0] sm:$0xff]
        %v443 = vld [vmem:[#allocation9 + $0xd8] sm:$0xff]
        %v444 = vld [vmem:[#allocation9 + $0xe0] sm:$0xff]
        %v445 = vld [vmem:[#allocation9 + $0xe8] sm:$0xff]
        %v446 = vld [vmem:[#allocation9 + $0xf0] sm:$0xff]
        %v447 = vld [vmem:[#allocation9 + $0xf8] sm:$0xff]
        %v448 = vld [vmem:[%s5] sm:$0x3]
        %v450 = vlaneseq
        %v451 = vshrl.u32 %v450, 7
        %v452 = vsub.s32 0, %v451
        %v453 = vrot.slane %v448, %v452
        %v454 = vlaneseq
        %v455 = vshrl.u32 %v454, 7
        %v456 = vsub.s32 1, %v455
        %v457 = vrot.slane %v448, %v456
        %v492 = vunpack.c.l.b16 %v416
        %v493 = vunpack.c.h.b16 %v416
        %v494 = vunpack.c.l.b16 %v417
        %v495 = vunpack.c.h.b16 %v417
        %v496 = vunpack.c.l.b16 %v418
        %v497 = vunpack.c.h.b16 %v418
        %v498 = vunpack.c.l.b16 %v419
        %v499 = vunpack.c.h.b16 %v419
        %v500 = vunpack.c.l.b16 %v420
        %v501 = vunpack.c.h.b16 %v420
        %v502 = vunpack.c.l.b16 %v421
        %v503 = vunpack.c.h.b16 %v421
        %v504 = vunpack.c.l.b16 %v422
        %v505 = vunpack.c.h.b16 %v422
        %v506 = vunpack.c.l.b16 %v423
        %v507 = vunpack.c.h.b16 %v423
        %v508 = vunpack.c.l.b16 %v424
        %v509 = vunpack.c.h.b16 %v424
        %v510 = vunpack.c.l.b16 %v425
        %v511 = vunpack.c.h.b16 %v425
        %v512 = vunpack.c.l.b16 %v426
        %v513 = vunpack.c.h.b16 %v426
        %v514 = vunpack.c.l.b16 %v427
        %v515 = vunpack.c.h.b16 %v427
        %v516 = vunpack.c.l.b16 %v428
        %v517 = vunpack.c.h.b16 %v428
        %v518 = vunpack.c.l.b16 %v429
        %v519 = vunpack.c.h.b16 %v429
        %v520 = vunpack.c.l.b16 %v430
        %v521 = vunpack.c.h.b16 %v430
        %v522 = vunpack.c.l.b16 %v431
        %v523 = vunpack.c.h.b16 %v431
        %v524 = vunpack.c.l.b16 %v432
        %v525 = vunpack.c.h.b16 %v432
        %v526 = vunpack.c.l.b16 %v433
        %v527 = vunpack.c.h.b16 %v433
        %v528 = vunpack.c.l.b16 %v434
        %v529 = vunpack.c.h.b16 %v434
        %v530 = vunpack.c.l.b16 %v435
        %v531 = vunpack.c.h.b16 %v435
        %v532 = vunpack.c.l.b16 %v436
        %v533 = vunpack.c.h.b16 %v436
        %v534 = vunpack.c.l.b16 %v437
        %v535 = vunpack.c.h.b16 %v437
        %v536 = vunpack.c.l.b16 %v438
        %v537 = vunpack.c.h.b16 %v438
        %v538 = vunpack.c.l.b16 %v439
        %v539 = vunpack.c.h.b16 %v439
        %v540 = vunpack.c.l.b16 %v440
        %v541 = vunpack.c.h.b16 %v440
        %v542 = vunpack.c.l.b16 %v441
        %v543 = vunpack.c.h.b16 %v441
        %v544 = vunpack.c.l.b16 %v442
        %v545 = vunpack.c.h.b16 %v442
        %v546 = vunpack.c.l.b16 %v443
        %v547 = vunpack.c.h.b16 %v443
        %v548 = vunpack.c.l.b16 %v444
        %v549 = vunpack.c.h.b16 %v444
        %v550 = vunpack.c.l.b16 %v445
        %v551 = vunpack.c.h.b16 %v445
        %v552 = vunpack.c.l.b16 %v446
        %v553 = vunpack.c.h.b16 %v446
        %v554 = vunpack.c.l.b16 %v447
        %v555 = vunpack.c.h.b16 %v447
        %v556 = vpack.c.b16 %v494, %v492
        %v557 = vpack.c.b16 %v495, %v493
        %v558 = vpack.c.b16 %v498, %v496
        %v559 = vpack.c.b16 %v499, %v497
        %v560 = vpack.c.b16 %v502, %v500
        %v561 = vpack.c.b16 %v503, %v501
        %v562 = vpack.c.b16 %v506, %v504
        %v563 = vpack.c.b16 %v507, %v505
        %v564 = vpack.c.b16 %v510, %v508
        %v565 = vpack.c.b16 %v511, %v509
        %v566 = vpack.c.b16 %v514, %v512
        %v567 = vpack.c.b16 %v515, %v513
        %v568 = vpack.c.b16 %v518, %v516
        %v569 = vpack.c.b16 %v519, %v517
        %v570 = vpack.c.b16 %v522, %v520
        %v571 = vpack.c.b16 %v523, %v521
        %v572 = vpack.c.b16 %v526, %v524
        %v573 = vpack.c.b16 %v527, %v525
        %v574 = vpack.c.b16 %v530, %v528
        %v575 = vpack.c.b16 %v531, %v529
        %v576 = vpack.c.b16 %v534, %v532
        %v577 = vpack.c.b16 %v535, %v533
        %v578 = vpack.c.b16 %v538, %v536
        %v579 = vpack.c.b16 %v539, %v537
        %v580 = vpack.c.b16 %v542, %v540
        %v581 = vpack.c.b16 %v543, %v541
        %v582 = vpack.c.b16 %v546, %v544
        %v583 = vpack.c.b16 %v547, %v545
        %v584 = vpack.c.b16 %v550, %v548
        %v585 = vpack.c.b16 %v551, %v549
        %v586 = vpack.c.b16 %v554, %v552
        %v587 = vpack.c.b16 %v555, %v553
        %620 = vmatprep.subr.bf16.mxu0 %v557
        %621 = vmatpush1.bf16.msra.mxu0 %v556
        %622 = vmatprep.subr.bf16.mxu0 %v559
        %623 = vmatpush1.bf16.msra.mxu0 %v558
        %624 = vmatprep.subr.bf16.mxu0 %v561
        %625 = vmatpush1.bf16.msra.mxu0 %v560
        %626 = vmatprep.subr.bf16.mxu0 %v563
        %627 = vmatpush1.bf16.msra.mxu0 %v562
        %628 = vmatprep.subr.bf16.mxu0 %v565
        %629 = vmatpush1.bf16.msra.mxu0 %v564
        %630 = vmatprep.subr.bf16.mxu0 %v567
        %631 = vmatpush1.bf16.msra.mxu0 %v566
        %632 = vmatprep.subr.bf16.mxu0 %v569
        %633 = vmatpush1.bf16.msra.mxu0 %v568
        %634 = vmatprep.subr.bf16.mxu0 %v571
        %635 = vmatpush1.bf16.msra.mxu0 %v570
        %636 = vmatprep.subr.bf16.mxu0 %v573
        %637 = vmatpush1.bf16.msra.mxu0 %v572
        %638 = vmatprep.subr.bf16.mxu0 %v575
        %639 = vmatpush1.bf16.msra.mxu0 %v574
        %640 = vmatprep.subr.bf16.mxu0 %v577
        %641 = vmatpush1.bf16.msra.mxu0 %v576
        %642 = vmatprep.subr.bf16.mxu0 %v579
        %643 = vmatpush1.bf16.msra.mxu0 %v578
        %644 = vmatprep.subr.bf16.mxu0 %v581
        %645 = vmatpush1.bf16.msra.mxu0 %v580
        %646 = vmatprep.subr.bf16.mxu0 %v583
        %647 = vmatpush1.bf16.msra.mxu0 %v582
        %648 = vmatprep.subr.bf16.mxu0 %v585
        %649 = vmatpush1.bf16.msra.mxu0 %v584
        %650 = vmatprep.subr.bf16.mxu0 %v587
        %651 = vmatpush1.bf16.msra.mxu0 %v586
        %652 = vmatprep.mubr.bf16.mxu0 %v415
        %653 = vmatmul.mubr.bf16.gmra.mrb[0].mxu0 %v414
        %v654 = vpop.f32.mrb[0].mxu0
        %v655 = vadd.f32 %v453, %v654
        %v656 = vpop.f32.mrb[0].mxu0
        %v657 = vadd.f32 %v457, %v656
        %v658 = vpop.f32.mrb[0].mxu0
        %v659 = vpop.f32.mrb[0].mxu0
        %660 = vdwg.mxu0
        %v661 = vmax.f32 %v655, 0.0
        %v662 = vmax.f32 %v657, 0.0
        %v663 = vpack.c.bf16 %v661, %v661
        %v664 = vpack.c.bf16 %v662, %v662
        %v665 = vld [vmem:[#allocation10] sm:$0xf]
        %v666 = vld [vmem:[#allocation10 + $0x4] sm:$0xf]
        %v667 = vld [vmem:[#allocation10 + $0x8] sm:$0xf]
        %v668 = vld [vmem:[#allocation10 + $0xc] sm:$0xf]
        %v669 = vld [vmem:[#allocation10 + $0x10] sm:$0xf]
        %v670 = vld [vmem:[#allocation10 + $0x14] sm:$0xf]
        %v671 = vld [vmem:[#allocation10 + $0x18] sm:$0xf]
        %v672 = vld [vmem:[#allocation10 + $0x1c] sm:$0xf]
        %v673 = vld [vmem:[#allocation10 + $0x20] sm:$0xf]
        %v674 = vld [vmem:[#allocation10 + $0x24] sm:$0xf]
        %v675 = vld [vmem:[#allocation10 + $0x28] sm:$0xf]
        %v676 = vld [vmem:[#allocation10 + $0x2c] sm:$0xf]
        %v677 = vld [vmem:[#allocation10 + $0x30] sm:$0xf]
        %v678 = vld [vmem:[#allocation10 + $0x34] sm:$0xf]
        %v679 = vld [vmem:[#allocation10 + $0x38] sm:$0xf]
        %v680 = vld [vmem:[#allocation10 + $0x3c] sm:$0xf]
        %v681 = vld [vmem:[#allocation10 + $0x40] sm:$0xf]
        %v682 = vld [vmem:[#allocation10 + $0x44] sm:$0xf]
        %v683 = vld [vmem:[#allocation10 + $0x48] sm:$0xf]
        %v684 = vld [vmem:[#allocation10 + $0x4c] sm:$0xf]
        %v685 = vld [vmem:[#allocation10 + $0x50] sm:$0xf]
        %v686 = vld [vmem:[#allocation10 + $0x54] sm:$0xf]
        %v687 = vld [vmem:[#allocation10 + $0x58] sm:$0xf]
        %v688 = vld [vmem:[#allocation10 + $0x5c] sm:$0xf]
        %v689 = vld [vmem:[#allocation10 + $0x60] sm:$0xf]
        %v690 = vld [vmem:[#allocation10 + $0x64] sm:$0xf]
        %v691 = vld [vmem:[#allocation10 + $0x68] sm:$0xf]
        %v692 = vld [vmem:[#allocation10 + $0x6c] sm:$0xf]
        %v693 = vld [vmem:[#allocation10 + $0x70] sm:$0xf]
        %v694 = vld [vmem:[#allocation10 + $0x74] sm:$0xf]
        %v695 = vld [vmem:[#allocation10 + $0x78] sm:$0xf]
        %v696 = vld [vmem:[#allocation10 + $0x7c] sm:$0xf]
        %v697 = vld [vmem:[%s7] sm:$0x1]
        %v699 = vlaneseq
        %v700 = vshrl.u32 %v699, 7
        %v701 = vsub.s32 0, %v700
        %v702 = vrot.slane %v697, %v701
        %v736 = vunpack.c.l.b16 %v665
        %v737 = vunpack.c.l.b16 %v666
        %v738 = vunpack.c.l.b16 %v667
        %v739 = vunpack.c.l.b16 %v668
        %v740 = vunpack.c.l.b16 %v669
        %v741 = vunpack.c.l.b16 %v670
        %v742 = vunpack.c.l.b16 %v671
        %v743 = vunpack.c.l.b16 %v672
        %v744 = vunpack.c.l.b16 %v673
        %v745 = vunpack.c.l.b16 %v674
        %v746 = vunpack.c.l.b16 %v675
        %v747 = vunpack.c.l.b16 %v676
        %v748 = vunpack.c.l.b16 %v677
        %v749 = vunpack.c.l.b16 %v678
        %v750 = vunpack.c.l.b16 %v679
        %v751 = vunpack.c.l.b16 %v680
        %v752 = vunpack.c.l.b16 %v681
        %v753 = vunpack.c.l.b16 %v682
        %v754 = vunpack.c.l.b16 %v683
        %v755 = vunpack.c.l.b16 %v684
        %v756 = vunpack.c.l.b16 %v685
        %v757 = vunpack.c.l.b16 %v686
        %v758 = vunpack.c.l.b16 %v687
        %v759 = vunpack.c.l.b16 %v688
        %v760 = vunpack.c.l.b16 %v689
        %v761 = vunpack.c.l.b16 %v690
        %v762 = vunpack.c.l.b16 %v691
        %v763 = vunpack.c.l.b16 %v692
        %v764 = vunpack.c.l.b16 %v693
        %v765 = vunpack.c.l.b16 %v694
        %v766 = vunpack.c.l.b16 %v695
        %v767 = vunpack.c.l.b16 %v696
        %v768 = vpack.c.b16 %v737, %v736
        %v769 = vpack.c.b16 %v739, %v738
        %v770 = vpack.c.b16 %v741, %v740
        %v771 = vpack.c.b16 %v743, %v742
        %v772 = vpack.c.b16 %v745, %v744
        %v773 = vpack.c.b16 %v747, %v746
        %v774 = vpack.c.b16 %v749, %v748
        %v775 = vpack.c.b16 %v751, %v750
        %v776 = vpack.c.b16 %v753, %v752
        %v777 = vpack.c.b16 %v755, %v754
        %v778 = vpack.c.b16 %v757, %v756
        %v779 = vpack.c.b16 %v759, %v758
        %v780 = vpack.c.b16 %v761, %v760
        %v781 = vpack.c.b16 %v763, %v762
        %v782 = vpack.c.b16 %v765, %v764
        %v783 = vpack.c.b16 %v767, %v766
        %800 = vmatprep.subr.bf16.mxu0 0
        %801 = vmatpush1.bf16.msra.mxu0 %v768
        %802 = vmatprep.subr.bf16.mxu0 0
        %803 = vmatpush1.bf16.msra.mxu0 %v769
        %804 = vmatprep.subr.bf16.mxu0 0
        %805 = vmatpush1.bf16.msra.mxu0 %v770
        %806 = vmatprep.subr.bf16.mxu0 0
        %807 = vmatpush1.bf16.msra.mxu0 %v771
        %808 = vmatprep.subr.bf16.mxu0 0
        %809 = vmatpush1.bf16.msra.mxu0 %v772
        %810 = vmatprep.subr.bf16.mxu0 0
        %811 = vmatpush1.bf16.msra.mxu0 %v773
        %812 = vmatprep.subr.bf16.mxu0 0
        %813 = vmatpush1.bf16.msra.mxu0 %v774
        %814 = vmatprep.subr.bf16.mxu0 0
        %815 = vmatpush1.bf16.msra.mxu0 %v775
        %816 = vmatprep.subr.bf16.mxu0 0
        %817 = vmatpush1.bf16.msra.mxu0 %v776
        %818 = vmatprep.subr.bf16.mxu0 0
        %819 = vmatpush1.bf16.msra.mxu0 %v777
        %820 = vmatprep.subr.bf16.mxu0 0
        %821 = vmatpush1.bf16.msra.mxu0 %v778
        %822 = vmatprep.subr.bf16.mxu0 0
        %823 = vmatpush1.bf16.msra.mxu0 %v779
        %824 = vmatprep.subr.bf16.mxu0 0
        %825 = vmatpush1.bf16.msra.mxu0 %v780
        %826 = vmatprep.subr.bf16.mxu0 0
        %827 = vmatpush1.bf16.msra.mxu0 %v781
        %828 = vmatprep.subr.bf16.mxu0 0
        %829 = vmatpush1.bf16.msra.mxu0 %v782
        %830 = vmatprep.subr.bf16.mxu0 0
        %831 = vmatpush1.bf16.msra.mxu0 %v783
        %832 = vmatprep.mubr.bf16.mxu0 %v664
        %833 = vmatmul.mubr.bf16.gmra.mrb[0].mxu0 %v663
        %v834 = vpop.f32.mrb[0].mxu0
        %v835 = vadd.f32 %v702, %v834
        %v836 = vpop.f32.mrb[0].mxu0
        %v837 = vpop.f32.mrb[0].mxu0
        %v838 = vpop.f32.mrb[0].mxu0
        %839 = vdwg.mxu0
        %v840 = vtanh.pop %v835
        %s841 = sld [smem:[#allocation3]]
        %v842 = vstv %s841
        %v843 = vmul.f32 %v842, %v840
        %844 = vst [vmem:[%s339] sm:$0xff] %v843
        %s845 = sand.u32 %s188, 1
        %s846 = scalar_lea.sflag [#allocation6], %s845
        %s847 = sand.u32 %s188, 1
        %s848 = smul.addr %s847, 8
        %s849 = scalar_lea.vmem [#allocation12], %s848
        // Predicated region
        $region65: #{tpu_custom_call.1} parent=47 // pred_check
          %p850 = pneg %p198
        $region66: #{tpu_custom_call.1} parent=47 // pred_check_branch
          %852 = sbr.rel (%p850) target = $region68
        $region67: #{tpu_custom_call.1} parent=47 // pred_region
          %s854 = ssub.s32 128, 128
          %855 = vsyncadd %s846, %s854
          %s856 = smul.addr %s28, 128
          %s857 = scalar_lea.hbm %s8, %s856
          %s859 = sshll.u32 %s849, 4
          %s860 = int_to_ptr.vmem [resolvable:$true] %s859
          %862 = dma.vmem_to_hbm [thread:$0]  %s860, 128, %s857, %s846
        $region68: #{tpu_custom_call.1} parent=47 // pred_fallthru
          _
      $region48: #{tpu_custom_call.1} parent=5 // pred_fallthru
        _
      %p863 = scmp.le.s32.totalorder 2, %s23
      // Predicated region
      $region69: #{tpu_custom_call.1} parent=5 // pred_check
        %p864 = pneg %p863
      $region70: #{tpu_custom_call.1} parent=5 // pred_check_branch
        %866 = sbr.rel (%p864) target = $region72
      $region71: #{tpu_custom_call.1} parent=5 // pred_region
        %s867 = ssub.s32 %s23, 2
        // Predicated region
        $region73: #{tpu_custom_call.1} parent=71 // pred_check
          %p868 = pneg %p204
        $region74: #{tpu_custom_call.1} parent=71 // pred_check_branch
          %870 = sbr.rel (%p868) target = $region76
        $region75: #{tpu_custom_call.1} parent=71 // pred_region
          %s871 = sand.u32 %s189, 1
          %s872 = scalar_lea.sflag [#allocation6], %s871
          %s873 = sand.u32 %s189, 1
          %s874 = smul.addr %s873, 8
          %s875 = scalar_lea.vmem [#allocation12], %s874
          %876 = dma.done %s872, 128
        $region76: #{tpu_custom_call.1} parent=71 // pred_fallthru
          _
      $region72: #{tpu_custom_call.1} parent=5 // pred_fallthru
        _
    $region6: #{tpu_custom_call.1} parent=1 // loop_footer
      %s27 = sadd.s32 1, %s23
    $region7: #{tpu_custom_call.1} parent=1 // loop_footer_branch
      %22 = sbr.rel target = $region3
    $region8: #{tpu_custom_call.1} parent=1 // loop_exit
      _
    %877 = vsyncpa [#allocation5], 1
    %s878 = scalar_lea.sflag [#allocation5], 1
    %879 = vsyncpa %s878, 1
    %880 = vsyncpa [#allocation8], 1
    %881 = vsyncpa [#allocation11], 1
    %882 = vsyncpa [#allocation6], 1
    %s883 = scalar_lea.sflag [#allocation6], 1
    %884 = vsyncpa %s883, 1

</llo_original>
